<compile_context>
chip_gen: v5e
topology: v5e:2x2
jax: 0.10.0
libtpu: 0.0.40
codegen_flags: <defaults>
</compile_context>

<pallas_src>
import functools

import jax
import jax.numpy as jnp
from jax.experimental import pallas as pl
from jax.experimental.pallas import tpu as pltpu

_LANE = 128


def _noise_layer_kernel(t_c, n_c, x_ref, noise_ref, w_ref, b_ref, o_ref):
    # x_ref / o_ref : (1, t_c, t_hw)
    # noise_ref     : (1, 1, t_hw)      broadcast over channels
    # w_ref / b_ref : (C_pad, 1)        fully resident; slice current channel window
    if n_c == 1:
        w2 = w_ref[...]
        b2 = b_ref[...]
    else:
        # t_c is a multiple of 8 whenever n_c > 1, so the slice start is aligned.
        c0 = pl.multiple_of(pl.program_id(2) * t_c, 8)
        w2 = w_ref[pl.ds(c0, t_c), :]
        b2 = b_ref[pl.ds(c0, t_c), :]
    w = w2.astype(jnp.float32)[None]          # (1, t_c, 1)
    b = b2.astype(jnp.float32)[None]          # (1, t_c, 1)
    x = x_ref[...].astype(jnp.float32)        # (1, t_c, t_hw)
    nz = noise_ref[...].astype(jnp.float32)   # (1, 1, t_hw)
    # Single fused expression -> one vst per output vreg, no VMEM temporaries.
    o_ref[...] = (x + w * nz + b).astype(o_ref.dtype)


def _cdiv(a, b):
    return -(-a // b)


def _round_up(a, b):
    return _cdiv(a, b) * b


def _vmem_budgets():
    """(per-x-tile byte budget, scoped vmem_limit_bytes), generation-aware."""
    try:
        phys = int(pltpu.get_tpu_info().vmem_capacity_bytes)
    except Exception:
        phys = 64 * 1024 * 1024  # conservative (v7x-sized) fallback
    if phys >= 100 * 1024 * 1024:
        # v5e / v6e: 128 MiB physical VMEM -> big tiles, 64 MiB scoped limit.
        return 8 * 1024 * 1024, 64 * 1024 * 1024
    # v7x: 64 MiB per TensorCore, shared with compiler scratch -> stay modest.
    return 4 * 1024 * 1024, 40 * 1024 * 1024


def _select_tiles(N, C, HW, itemsize, x_tile_budget):
    """Byte-budgeted tile selection with min-step guarantees."""
    sub = max(8, 32 // itemsize)  # sublane packing: 8 f32 / 16 bf16 / 32 int8

    # Lane (H*W) tile: as large as practical, always a multiple of 128.
    hw_cap = 16384
    HW128 = _round_up(HW, _LANE)
    n_hw = _cdiv(HW128, hw_cap)
    t_hw = _round_up(_cdiv(HW128, n_hw), _LANE)
    HW_pad = t_hw * n_hw

    # Channel tile from the per-tile byte budget.
    t_c_budget = max(sub, (x_tile_budget // (t_hw * itemsize)) // sub * sub)
    if t_c_budget >= C:
        t_c, n_c = C, 1  # full channel dim is always a legal block
    else:
        t_c = t_c_budget
        n_c = _cdiv(C, t_c)
    C_pad = t_c * n_c

    # Ensure enough grid steps for double-buffering and for megacore sharding
    # on v7x (2 TensorCores), without shrinking tiles into the
    # step-overhead-dominated regime. Splitting channels first is cheap:
    # weight/bias stay resident and only the tiny noise tile is re-fetched.
    min_steps = 4
    min_tile_bytes = 512 * 1024
    while (N * n_hw * n_c < min_steps
           and t_c >= 2 * sub
           and (t_c // 2) * t_hw * itemsize >= min_tile_bytes):
        cand = _round_up(_cdiv(t_c, 2), sub)
        if cand >= t_c:
            break
        t_c = cand
        n_c = _cdiv(C, t_c)
        C_pad = t_c * n_c
    while (N * n_hw * n_c < min_steps
           and t_hw >= 2 * _LANE
           and (t_hw // 2) * t_c * itemsize >= min_tile_bytes):
        cand = _round_up(_cdiv(t_hw, 2), _LANE)
        if cand >= t_hw:
            break
        t_hw = cand
        n_hw = _cdiv(HW128, t_hw)
        HW_pad = t_hw * n_hw

    return t_c, n_c, C_pad, t_hw, n_hw, HW_pad


def noise_layer(x, weight, bias, noise):
    """x: (N, C, H, W); weight/bias: (1, C, 1, 1); noise: (N, 1, H, W)."""
    N, C, H, W = x.shape
    HW = H * W
    itemsize = jnp.dtype(x.dtype).itemsize

    x_tile_budget, vmem_limit = _vmem_budgets()
    t_c, n_c, C_pad, t_hw, n_hw, HW_pad = _select_tiles(
        N, C, HW, itemsize, x_tile_budget)

    # Lane-dense layouts (trailing dim = H*W).
    x3 = x.reshape(N, C, HW)
    noise3 = noise.reshape(N, 1, HW)
    w2 = weight.reshape(C, 1)
    b2 = bias.reshape(C, 1)

    # Explicit zero padding for indivisible dims (sliced off afterwards).
    if HW_pad != HW:
        x3 = jnp.pad(x3, ((0, 0), (0, 0), (0, HW_pad - HW)))
        noise3 = jnp.pad(noise3, ((0, 0), (0, 0), (0, HW_pad - HW)))
    if C_pad != C:
        x3 = jnp.pad(x3, ((0, 0), (0, C_pad - C), (0, 0)))
        w2 = jnp.pad(w2, ((0, C_pad - C), (0, 0)))
        b2 = jnp.pad(b2, ((0, C_pad - C), (0, 0)))

    grid = (N, n_hw, n_c)  # channel axis innermost -> noise tile reused across c

    out3 = pl.pallas_call(
        functools.partial(_noise_layer_kernel, t_c, n_c),
        out_shape=jax.ShapeDtypeStruct((N, C_pad, HW_pad), x.dtype),
        grid_spec=pltpu.PrefetchScalarGridSpec(
            num_scalar_prefetch=0,
            grid=grid,
            in_specs=[
                # x: distinct tile per (n, hw, c)
                pl.BlockSpec((1, t_c, t_hw), lambda n, hw, c: (n, c, hw)),
                # noise: independent of c -> stays resident across channel tiles
                pl.BlockSpec((1, 1, t_hw), lambda n, hw, c: (n, 0, hw)),
                # weight / bias: fully VMEM-resident (constant block index,
                # single tiny DMA for the whole kernel)
                pl.BlockSpec((C_pad, 1), lambda n, hw, c: (0, 0)),
                pl.BlockSpec((C_pad, 1), lambda n, hw, c: (0, 0)),
            ],
            out_specs=pl.BlockSpec((1, t_c, t_hw), lambda n, hw, c: (n, c, hw)),
        ),
        compiler_params=pltpu.CompilerParams(
            # No accumulator -> every axis is shardable across TensorCores,
            # so v7x's 2 cores both get work even for N == 1 shapes.
            dimension_semantics=("parallel", "parallel", "parallel"),
            vmem_limit_bytes=vmem_limit,
        ),
    )(x3, noise3, w2, b2)

    if C_pad != C or HW_pad != HW:
        out3 = out3[:, :C, :HW]
    return out3.reshape(N, C, H, W)


if __name__ == "__main__":
    key = jax.random.PRNGKey(0)
    k_x, k_noise, k_w, k_b = jax.random.split(key, 4)

    N, C, H, W = 2, 4, 16, 16
    x = jax.random.normal(k_x, (N, C, H, W), dtype=jnp.float32)

    # torch.randn(x.shape[0], 1, x.shape[2], x.shape[3]) analogue.
    noise = jax.random.normal(k_noise, (N, 1, H, W), dtype=jnp.float32)

    # Module __init__ uses zeros for weight/bias; deterministic non-zero values
    # here so the broadcasting path is actually exercised.
    weight = 0.1 * jax.random.normal(k_w, (1, C, 1, 1), dtype=jnp.float32)
    bias = 0.1 * jax.random.normal(k_b, (1, C, 1, 1), dtype=jnp.float32)

    out = noise_layer(x, weight, bias, noise)
    out = jax.block_until_ready(out)

    ref = x + weight * noise + bias
    assert out.shape == (N, C, H, W)
    assert jnp.allclose(out, ref, atol=1e-6, rtol=1e-6)

    print("KERNEL_OK")
</pallas_src>

<mosaic_0001>
module attributes {stable_mosaic.version = 11 : i64} {
  func.func @_noise_layer_kernel(%arg0: i32, %arg1: i32, %arg2: i32, %arg3: memref<1x4x256xf32, #tpu.memory_space<vmem>>, %arg4: memref<1x1x256xf32, #tpu.memory_space<vmem>>, %arg5: memref<4x1xf32, #tpu.memory_space<vmem>>, %arg6: memref<4x1xf32, #tpu.memory_space<vmem>>, %arg7: memref<1x4x256xf32, #tpu.memory_space<vmem>>) attributes {dimension_semantics = [#tpu.dimension_semantics<parallel>, #tpu.dimension_semantics<parallel>, #tpu.dimension_semantics<parallel>], iteration_bounds = array<i64: 2, 1, 1>, scalar_prefetch = 0 : i64, scratch_operands = 0 : i64, tpu.core_type = #tpu.core_type<tc>, window_params = [{transform_indices = @transform_0, window_bounds = array<i64: 1, 4, 256>}, {transform_indices = @transform_1, window_bounds = array<i64: 1, 1, 256>}, {pipeline_mode = #tpu.pipeline_mode<synchronous>, transform_indices = @transform_2, window_bounds = array<i64: 4, 1>}, {pipeline_mode = #tpu.pipeline_mode<synchronous>, transform_indices = @transform_3, window_bounds = array<i64: 4, 1>}, {transform_indices = @transform_4, window_bounds = array<i64: 1, 4, 256>}]} {
    %c0 = arith.constant 0 : index
    %c0_0 = arith.constant 0 : index
    %0 = vector.load %arg5[%c0, %c0_0] : memref<4x1xf32, #tpu.memory_space<vmem>>, vector<4x1xf32>
    %c0_1 = arith.constant 0 : index
    %c0_2 = arith.constant 0 : index
    %1 = vector.load %arg6[%c0_1, %c0_2] : memref<4x1xf32, #tpu.memory_space<vmem>>, vector<4x1xf32>
    %2 = vector.shape_cast %0 : vector<4x1xf32> to vector<1x4x1xf32>
    %3 = vector.shape_cast %1 : vector<4x1xf32> to vector<1x4x1xf32>
    %c0_3 = arith.constant 0 : index
    %c0_4 = arith.constant 0 : index
    %c0_5 = arith.constant 0 : index
    %4 = vector.load %arg3[%c0_3, %c0_4, %c0_5] : memref<1x4x256xf32, #tpu.memory_space<vmem>>, vector<1x4x256xf32>
    %c0_6 = arith.constant 0 : index
    %c0_7 = arith.constant 0 : index
    %c0_8 = arith.constant 0 : index
    %5 = vector.load %arg4[%c0_6, %c0_7, %c0_8] : memref<1x1x256xf32, #tpu.memory_space<vmem>>, vector<1x1x256xf32>
    %6 = vector.broadcast %2 : vector<1x4x1xf32> to vector<1x4x256xf32>
    %7 = vector.broadcast %5 : vector<1x1x256xf32> to vector<1x4x256xf32>
    %8 = arith.mulf %6, %7 : vector<1x4x256xf32>
    %9 = arith.addf %4, %8 : vector<1x4x256xf32>
    %10 = vector.broadcast %3 : vector<1x4x1xf32> to vector<1x4x256xf32>
    %11 = arith.addf %9, %10 : vector<1x4x256xf32>
    %c0_9 = arith.constant 0 : index
    %c0_10 = arith.constant 0 : index
    %c0_11 = arith.constant 0 : index
    %12 = vector.load %arg7[%c0_9, %c0_10, %c0_11] : memref<1x4x256xf32, #tpu.memory_space<vmem>>, vector<1x4x256xf32>
    tpu.vector_store %arg7[%c0_9, %c0_10, %c0_11], %11 {strides = array<i32>} : memref<1x4x256xf32, #tpu.memory_space<vmem>>, vector<1x4x256xf32>,
    return
  }
  func.func @transform_0(%arg0: i32, %arg1: i32, %arg2: i32) -> (i32, i32, i32) {
    %c0_i32 = arith.constant 0 : i32
    return %arg0, %arg2, %arg1 : i32, i32, i32
  }
  func.func @transform_1(%arg0: i32, %arg1: i32, %arg2: i32) -> (i32, i32, i32) {
    %c0_i32 = arith.constant 0 : i32
    %c0_i32_0 = arith.constant 0 : i32
    return %arg0, %c0_i32, %arg1 : i32, i32, i32
  }
  func.func @transform_2(%arg0: i32, %arg1: i32, %arg2: i32) -> (i32, i32) {
    %c0_i32 = arith.constant 0 : i32
    %c0_i32_0 = arith.constant 0 : i32
    %c0_i32_1 = arith.constant 0 : i32
    return %c0_i32, %c0_i32_0 : i32, i32
  }
  func.func @transform_3(%arg0: i32, %arg1: i32, %arg2: i32) -> (i32, i32) {
    %c0_i32 = arith.constant 0 : i32
    %c0_i32_0 = arith.constant 0 : i32
    %c0_i32_1 = arith.constant 0 : i32
    return %c0_i32, %c0_i32_0 : i32, i32
  }
  func.func @transform_4(%arg0: i32, %arg1: i32, %arg2: i32) -> (i32, i32, i32) {
    %c0_i32 = arith.constant 0 : i32
    return %arg0, %arg2, %arg1 : i32, i32, i32
  }
}

</mosaic_0001>

<llo_original>
// kernel: tpu_custom_call.1
$region0: #{tpu_custom_call.1}
  #allocation0 [shape = 'u32[]', space=smem, size = 0x4, offset = 0x4, fixed_abs, tag = 'smem constant byte address 0x4 - core index']
  #allocation1 [shape = 'u32[72,128]{1,0:T(1,128)}', space=vmem, size = 0x9000, scoped, tag = 'internal scratch']
  %s0 = inlined_call_operand.hbm [shape: f32[2,4,256], index: 0, kind: input, shape index: {}]
  %s1 = inlined_call_operand.vmem [shape: f32[2,1,256], index: 1, kind: input, shape index: {}]
  %s2 = inlined_call_operand.vmem [shape: f32[4,1], index: 2, kind: input, shape index: {}]
  %s3 = inlined_call_operand.vmem [shape: f32[4,1], index: 3, kind: input, shape index: {}]
  %s4 = inlined_call_operand.hbm [shape: f32[2,4,256], index: 4, kind: output, shape index: {}]
  %s5 = sld [smem:[#allocation0]]
  $region53: #{tpu_custom_call.1} parent=0
    _
  %s7 = ssub.s32 1, %s5
  %s8 = scalar_select 0, %s7, %s5
  $region1: #{tpu_custom_call.1} parent=0
    #allocation2 [shape = 'u8[8192]{0}', space=vmem, size = 0x2000, scoped, tag = 'input window, operand 0']
    #allocation3 [shape = 's32[2]{0}', space=sflag, size = 0x8, scoped, tag = 'scoped memory for tpu_custom_call.1']
    #allocation4 [shape = 's32[2]{0}', space=sflag, size = 0x8, scoped, tag = 'scoped memory for tpu_custom_call.1']
    #allocation5 [shape = 'u8[8192]{0}', space=vmem, size = 0x2000, scoped, tag = 'output window, operand 0']
    %9 = vsyncpa [#allocation3], 0
    %s10 = scalar_lea.sflag [#allocation3], 1
    %11 = vsyncpa %s10, 0
    %12 = vsyncpa [#allocation4], 0
    %s13 = scalar_lea.sflag [#allocation4], 1
    %14 = vsyncpa %s13, 0
    loop: start=0, step=1, limit=4
    $region2: #{tpu_custom_call.1} parent=1 // loop_pre_header
      _
    $region3: #{tpu_custom_call.1} parent=1 // loop_header
      %s16 = sphi 0, %s20
      %p17 = scmp.ge.s32.totalorder %s16, 4
      %s23 = sphi 0, %s42
      %s24 = sphi 0, %s38
      %s25 = sphi 0, %s34
      %s26 = sphi 0, %s23
      %s27 = sphi 0, %s24
      %s28 = sphi 0, %s25
      %s29 = sphi 0, %s26
      %s30 = sphi 0, %s27
      %s31 = sphi 0, %s28
      %s49 = sphi 0, %s51
      %s52 = sphi 0, %s49
      %s53 = sphi 0, %s52
      %s69 = sphi 0, %s53
      %s77 = sphi 0, %s79
      %s80 = sphi 0, %s77
      %s81 = sphi 0, %s80
      %s97 = sphi 0, %s81
      %s101 = sphi 0, %s101
      %s103 = sphi 0, %s101
      %s104 = sphi 0, %s103
      %s118 = sphi 0, %s104
      %s122 = sphi 0, %s122
      %s124 = sphi 0, %s122
      %s125 = sphi 0, %s124
      %s139 = sphi 0, %s125
      %s149 = sphi 0, %s151
      %s152 = sphi 0, %s149
      %s153 = sphi 0, %s152
      %s169 = sphi 0, %s153
    $region4: #{tpu_custom_call.1} parent=1 // loop_header_branch
      %19 = sbr.rel (%p17) target = $region8
    $region5: #{tpu_custom_call.1} parent=1 // loop_body
      %s21 = ssub.s32 %s16, 1
      %s22 = ssub.s32 %s16, 2
      %s32 = sadd.s32 1, %s25
      %p33 = scmp.ge.s32.totalorder %s32, 1
      %s34 = scalar_select %p33, 0, %s32
      %s35 = sadd.s32 1, %s24
      %s36 = scalar_select %p33, %s35, %s24
      %p37 = scmp.ge.s32.totalorder %s36, 1
      %s38 = scalar_select %p37, 0, %s36
      %s39 = sadd.s32 1, %s23
      %s40 = scalar_select %p37, %s39, %s23
      %p41 = scmp.ge.s32.totalorder %s40, 2
      %s42 = scalar_select %p41, 0, %s40
      %s43 = ssub.s32 %s23, %s42
      %s44 = ssub.s32 %s25, %s34
      %s45 = sor.u32 %s43, %s44
      %s46 = ssub.s32 %s24, %s38
      %s47 = sor.u32 %s45, %s46
      %p48 = scmp.eq.s32.totalorder %s47, 0
      %s50 = sadd.s32 %s49, 1
      %s51 = scalar_select %p48, %s49, %s50
      %p54 = pneg %p48
      %p55 = scmp.eq.s32.totalorder %s16, 1
      %p56 = por %p54, %p55
      %p57 = scmp.ne.s32.totalorder %s49, %s52
      %p58 = scmp.eq.s32.totalorder %s16, 0
      %p59 = por %p57, %p58
      %p60 = scmp.ne.s32.totalorder %s49, %s52
      %p61 = scmp.eq.s32.totalorder %s21, 1
      %p62 = por %p60, %p61
      %p63 = scmp.ne.s32.totalorder %s52, %s53
      %p64 = scmp.eq.s32.totalorder %s21, 0
      %p65 = por %p63, %p64
      %p66 = scmp.ne.s32.totalorder %s52, %s53
      %p67 = scmp.eq.s32.totalorder %s22, 1
      %p68 = por %p66, %p67
      %p70 = scmp.ne.s32.totalorder %s53, %s69
      %p71 = scmp.eq.s32.totalorder %s22, 0
      %p72 = por %p70, %p71
      %s73 = ssub.s32 %s23, %s42
      %s74 = ssub.s32 %s24, %s38
      %s75 = sor.u32 %s73, %s74
      %p76 = scmp.eq.s32.totalorder %s75, 0
      %s78 = sadd.s32 %s77, 1
      %s79 = scalar_select %p76, %s77, %s78
      %p82 = pneg %p76
      %p83 = scmp.eq.s32.totalorder %s16, 1
      %p84 = por %p82, %p83
      %p85 = scmp.ne.s32.totalorder %s77, %s80
      %p86 = scmp.eq.s32.totalorder %s16, 0
      %p87 = por %p85, %p86
      %p88 = scmp.ne.s32.totalorder %s77, %s80
      %p89 = scmp.eq.s32.totalorder %s21, 1
      %p90 = por %p88, %p89
      %p91 = scmp.ne.s32.totalorder %s80, %s81
      %p92 = scmp.eq.s32.totalorder %s21, 0
      %p93 = por %p91, %p92
      %p94 = scmp.ne.s32.totalorder %s80, %s81
      %p95 = scmp.eq.s32.totalorder %s22, 1
      %p96 = por %p94, %p95
      %p98 = scmp.ne.s32.totalorder %s81, %s97
      %p99 = scmp.eq.s32.totalorder %s22, 0
      %p100 = por %p98, %p99
      %s102 = sadd.s32 %s101, 1
      %p105 = scmp.eq.s32.totalorder %s16, 1
      %p106 = scmp.ne.s32.totalorder %s101, %s103
      %p107 = scmp.eq.s32.totalorder %s16, 0
      %p108 = por %p106, %p107
      %p109 = scmp.ne.s32.totalorder %s101, %s103
      %p110 = scmp.eq.s32.totalorder %s21, 1
      %p111 = por %p109, %p110
      %p112 = scmp.ne.s32.totalorder %s103, %s104
      %p113 = scmp.eq.s32.totalorder %s21, 0
      %p114 = por %p112, %p113
      %p115 = scmp.ne.s32.totalorder %s103, %s104
      %p116 = scmp.eq.s32.totalorder %s22, 1
      %p117 = por %p115, %p116
      %p119 = scmp.ne.s32.totalorder %s104, %s118
      %p120 = scmp.eq.s32.totalorder %s22, 0
      %p121 = por %p119, %p120
      %s123 = sadd.s32 %s122, 1
      %p126 = scmp.eq.s32.totalorder %s16, 1
      %p127 = scmp.ne.s32.totalorder %s122, %s124
      %p128 = scmp.eq.s32.totalorder %s16, 0
      %p129 = por %p127, %p128
      %p130 = scmp.ne.s32.totalorder %s122, %s124
      %p131 = scmp.eq.s32.totalorder %s21, 1
      %p132 = por %p130, %p131
      %p133 = scmp.ne.s32.totalorder %s124, %s125
      %p134 = scmp.eq.s32.totalorder %s21, 0
      %p135 = por %p133, %p134
      %p136 = scmp.ne.s32.totalorder %s124, %s125
      %p137 = scmp.eq.s32.totalorder %s22, 1
      %p138 = por %p136, %p137
      %p140 = scmp.ne.s32.totalorder %s125, %s139
      %p141 = scmp.eq.s32.totalorder %s22, 0
      %p142 = por %p140, %p141
      %s143 = ssub.s32 %s23, %s42
      %s144 = ssub.s32 %s25, %s34
      %s145 = sor.u32 %s143, %s144
      %s146 = ssub.s32 %s24, %s38
      %s147 = sor.u32 %s145, %s146
      %p148 = scmp.eq.s32.totalorder %s147, 0
      %s150 = sadd.s32 %s149, 1
      %s151 = scalar_select %p148, %s149, %s150
      %p154 = pneg %p148
      %p155 = scmp.eq.s32.totalorder %s16, 1
      %p156 = por %p154, %p155
      %p157 = scmp.ne.s32.totalorder %s149, %s152
      %p158 = scmp.eq.s32.totalorder %s16, 0
      %p159 = por %p157, %p158
      %p160 = scmp.ne.s32.totalorder %s149, %s152
      %p161 = scmp.eq.s32.totalorder %s21, 1
      %p162 = por %p160, %p161
      %p163 = scmp.ne.s32.totalorder %s152, %s153
      %p164 = scmp.eq.s32.totalorder %s21, 0
      %p165 = por %p163, %p164
      %p166 = scmp.ne.s32.totalorder %s152, %s153
      %p167 = scmp.eq.s32.totalorder %s22, 1
      %p168 = por %p166, %p167
      %p170 = scmp.ne.s32.totalorder %s153, %s169
      %p171 = scmp.eq.s32.totalorder %s22, 0
      %p172 = por %p170, %p171
      %p173 = scmp.le.s32.totalorder 1, %s16
      %p174 = scmp.lt.s32.totalorder %s16, 3
      %p175 = pnand %p173, %p174
      %p176 = pneg %p175
      // Predicated region
      $region9: #{tpu_custom_call.1} parent=5 // pred_check
        _
      $region10: #{tpu_custom_call.1} parent=5 // pred_check_branch
        %178 = sbr.rel (%p175) target = $region12
      $region11: #{tpu_custom_call.1} parent=5 // pred_region
        %s179 = ssub.s32 %s16, 1
        // Predicated region
        $region13: #{tpu_custom_call.1} parent=11 // pred_check
          %p180 = pneg %p114
        $region14: #{tpu_custom_call.1} parent=11 // pred_check_branch
          %182 = sbr.rel (%p180) target = $region16
        $region15: #{tpu_custom_call.1} parent=11 // pred_region
          _
        $region16: #{tpu_custom_call.1} parent=11 // pred_fallthru
          _
        // Predicated region
        $region17: #{tpu_custom_call.1} parent=11 // pred_check
          %p183 = pneg %p135
        $region18: #{tpu_custom_call.1} parent=11 // pred_check_branch
          %185 = sbr.rel (%p183) target = $region20
        $region19: #{tpu_custom_call.1} parent=11 // pred_region
          _
        $region20: #{tpu_custom_call.1} parent=11 // pred_fallthru
          _
      $region12: #{tpu_custom_call.1} parent=5 // pred_fallthru
        _
      %p186 = scmp.lt.s32.totalorder %s16, 2
      // Predicated region
      $region21: #{tpu_custom_call.1} parent=5 // pred_check
        %p187 = pneg %p186
      $region22: #{tpu_custom_call.1} parent=5 // pred_check_branch
        %189 = sbr.rel (%p187) target = $region24
      $region23: #{tpu_custom_call.1} parent=5 // pred_region
        // Predicated region
        $region25: #{tpu_custom_call.1} parent=23 // pred_check
          %p190 = pneg %p59
        $region26: #{tpu_custom_call.1} parent=23 // pred_check_branch
          %192 = sbr.rel (%p190) target = $region28
        $region27: #{tpu_custom_call.1} parent=23 // pred_region
          %s193 = sand.u32 %s49, 1
          %s194 = scalar_lea.sflag [#allocation3], %s193
          %s195 = sand.u32 %s49, 1
          %s196 = smul.addr %s195, 8
          %s197 = scalar_lea.vmem [#allocation2], %s196
          %s198 = smul.u32 2, %s24
          %200 = vsyncadd %s194, 0
          %s201 = smul.addr %s25, 2
          %s202 = sadd.s32 %s198, %s201
          %s203 = smul.addr %s23, 2
          %s204 = sadd.s32 %s202, %s203
          %s205 = smul.addr %s204, 4
          %s206 = scalar_lea.hbm %s0, %s205
          %s208 = sshll.u32 %s206, 4
          %s209 = int_to_ptr.hbm [resolvable:$true] %s208
          %s210 = sshll.u32 %s197, 4
          %s211 = int_to_ptr.vmem [resolvable:$true] %s210
          %213 = dma.hbm_to_vmem [thread:$0]  %s209, 128, %s211, %s194
        $region28: #{tpu_custom_call.1} parent=23 // pred_fallthru
          _
        // Predicated region
        $region29: #{tpu_custom_call.1} parent=23 // pred_check
          %p214 = pneg %p87
        $region30: #{tpu_custom_call.1} parent=23 // pred_check_branch
          %216 = sbr.rel (%p214) target = $region32
        $region31: #{tpu_custom_call.1} parent=23 // pred_region
          %s217 = smul.u32 2, %s24
          %p218 = scmp.lt.s32.totalorder %s23, 1
          %s219 = scalar_select %p218, %s23, 1
          %p220 = scmp.lt.s32.totalorder %s217, 1
          %s221 = scalar_select %p220, %s217, 1
          %s222 = smul.addr %s219, 2
          %s223 = sadd.s32 %s221, %s222
          %s224 = scalar_lea.vmem %s1, %s223
          %s225 = smul.u32 2, %s24
        $region32: #{tpu_custom_call.1} parent=23 // pred_fallthru
          _
      $region24: #{tpu_custom_call.1} parent=5 // pred_fallthru
        _
      %p226 = scmp.le.s32.totalorder 1, %s16
      %p227 = scmp.lt.s32.totalorder %s16, 3
      %p228 = pnand %p226, %p227
      %p229 = pneg %p228
      // Predicated region
      $region33: #{tpu_custom_call.1} parent=5 // pred_check
        _
      $region34: #{tpu_custom_call.1} parent=5 // pred_check_branch
        %231 = sbr.rel (%p228) target = $region36
      $region35: #{tpu_custom_call.1} parent=5 // pred_region
        %s232 = ssub.s32 %s16, 1
        %s233 = sand.u32 %s52, 1
        %s234 = scalar_lea.sflag [#allocation3], %s233
        %s235 = sand.u32 %s52, 1
        %s236 = smul.addr %s235, 8
        %s237 = scalar_lea.vmem [#allocation2], %s236
        // Predicated region
        $region37: #{tpu_custom_call.1} parent=35 // pred_check
          %p238 = pneg %p65
        $region38: #{tpu_custom_call.1} parent=35 // pred_check_branch
          %240 = sbr.rel (%p238) target = $region40
        $region39: #{tpu_custom_call.1} parent=35 // pred_region
          %242 = dma.done %s234, 128
        $region40: #{tpu_custom_call.1} parent=35 // pred_fallthru
          _
        %s243 = sand.u32 %s52, 1
        %s244 = scalar_lea.sflag [#allocation3], %s243
        %s245 = sand.u32 %s52, 1
        %s246 = smul.addr %s245, 8
        %s247 = scalar_lea.vmem [#allocation2], %s246
        %p248 = pneg %p65
        %p249 = pneg %p62
        %s250 = smul.u32 2, %s27
        %p251 = scmp.lt.s32.totalorder %s26, 1
        %s252 = scalar_select %p251, %s26, 1
        %p253 = scmp.lt.s32.totalorder %s250, 1
        %s254 = scalar_select %p253, %s250, 1
        %s255 = smul.addr %s252, 2
        %s256 = sadd.s32 %s254, %s255
        %s257 = scalar_lea.vmem %s1, %s256
        %p258 = pneg %p93
        %p259 = pneg %p90
        %p260 = pneg %p114
        %p261 = pneg %p111
        %p262 = pneg %p135
        %p263 = pneg %p132
        %p264 = pneg %p165
        %p265 = pneg %p162
        %s266 = sand.u32 %s152, 1
        %s267 = scalar_lea.sflag [#allocation4], %s266
        %s268 = sand.u32 %s152, 1
        %s269 = smul.addr %s268, 8
        %s270 = scalar_lea.vmem [#allocation5], %s269
        %s271 = smul.u32 2, %s27
        %s272 = smul.u32 2, %s27
        %p273 = scmp.lt.s32.totalorder %s26, 1
        %s274 = scalar_select %p273, %s26, 1
        %p275 = scmp.lt.s32.totalorder %s272, 1
        %s276 = scalar_select %p275, %s272, 1
        %s277 = smul.addr %s274, 2
        %s278 = sadd.s32 %s276, %s277
        %s279 = scalar_lea.vmem %s1, %s278
        %s280 = smul.u32 2, %s27
        %s281 = smul.u32 2, %s27
        %v282 = vld [vmem:[%s2] sm:$0xf]
        %v283 = vld [vmem:[%s3] sm:$0xf]
        %v284 = vld [vmem:[%s237] sm:$0xff]
        %v285 = vld [vmem:[%s279] sm:$0x3]
        %287 = vset.pattern.permute.xlu0 0
        %288 = vperm.xlu0 %287, %v282
        %v289 = vpop.permute.xlu0 %288
        %v292 = vperm.slane %v285, 0
        %v293 = vperm.slane %v285, 1
        %v296 = vmul.f32 %v289, %v292
        %v297 = vmul.f32 %v289, %v293
        %v300 = vrot.slane %v297, 4
        %vm301 = vcmask 1043456
        %v302 = vsel %vm301, %v296, %v300
        %v304 = vadd.f32 %v284, %v302
        %306 = vset.pattern.permute.xlu0 0
        %307 = vperm.xlu0 %306, %v283
        %v308 = vpop.permute.xlu0 %307
        %v310 = vunpack.c.l.s4 839922192
        %v311 = vunpack.c.0.s8 %v310
        %v312 = vperm.slane %v308, %v311
        %v314 = vadd.f32 %v304, %v312
        %315 = vst [vmem:[%s270] sm:$0xff] %v314
        %s316 = sand.u32 %s152, 1
        %s317 = scalar_lea.sflag [#allocation4], %s316
        %s318 = sand.u32 %s152, 1
        %s319 = smul.addr %s318, 8
        %s320 = scalar_lea.vmem [#allocation5], %s319
        // Predicated region
        $region41: #{tpu_custom_call.1} parent=35 // pred_check
          %p321 = pneg %p162
        $region42: #{tpu_custom_call.1} parent=35 // pred_check_branch
          %323 = sbr.rel (%p321) target = $region44
        $region43: #{tpu_custom_call.1} parent=35 // pred_region
          %s324 = smul.u32 2, %s27
          %326 = vsyncadd %s317, 0
          %s327 = smul.addr %s28, 2
          %s328 = sadd.s32 %s324, %s327
          %s329 = smul.addr %s26, 2
          %s330 = sadd.s32 %s328, %s329
          %s331 = smul.addr %s330, 4
          %s332 = scalar_lea.hbm %s4, %s331
          %s334 = sshll.u32 %s320, 4
          %s335 = int_to_ptr.vmem [resolvable:$true] %s334
          %s336 = sshll.u32 %s332, 4
          %s337 = int_to_ptr.hbm [resolvable:$true] %s336
          %339 = dma.vmem_to_hbm [thread:$0]  %s335, 128, %s337, %s317
        $region44: #{tpu_custom_call.1} parent=35 // pred_fallthru
          _
      $region36: #{tpu_custom_call.1} parent=5 // pred_fallthru
        _
      %p340 = scmp.le.s32.totalorder 2, %s16
      // Predicated region
      $region45: #{tpu_custom_call.1} parent=5 // pred_check
        %p341 = pneg %p340
      $region46: #{tpu_custom_call.1} parent=5 // pred_check_branch
        %343 = sbr.rel (%p341) target = $region48
      $region47: #{tpu_custom_call.1} parent=5 // pred_region
        %s344 = ssub.s32 %s16, 2
        // Predicated region
        $region49: #{tpu_custom_call.1} parent=47 // pred_check
          %p345 = pneg %p168
        $region50: #{tpu_custom_call.1} parent=47 // pred_check_branch
          %347 = sbr.rel (%p345) target = $region52
        $region51: #{tpu_custom_call.1} parent=47 // pred_region
          %s348 = sand.u32 %s153, 1
          %s349 = scalar_lea.sflag [#allocation4], %s348
          %s350 = sand.u32 %s153, 1
          %s351 = smul.addr %s350, 8
          %s352 = scalar_lea.vmem [#allocation5], %s351
          %354 = dma.done %s349, 128
        $region52: #{tpu_custom_call.1} parent=47 // pred_fallthru
          _
      $region48: #{tpu_custom_call.1} parent=5 // pred_fallthru
        _
    $region6: #{tpu_custom_call.1} parent=1 // loop_footer
      %s20 = sadd.s32 1, %s16
    $region7: #{tpu_custom_call.1} parent=1 // loop_footer_branch
      %15 = sbr.rel target = $region3
    $region8: #{tpu_custom_call.1} parent=1 // loop_exit
      _
    %355 = vsyncpa [#allocation3], 1
    %s356 = scalar_lea.sflag [#allocation3], 1
    %357 = vsyncpa %s356, 1
    %358 = vsyncpa [#allocation4], 1
    %s359 = scalar_lea.sflag [#allocation4], 1
    %360 = vsyncpa %s359, 1

</llo_original>
